<compile_context>
chip_gen: v6e
topology: v6e:2x2x1
jax: 0.10.0
libtpu: 0.0.40
codegen_flags: <defaults>
</compile_context>

<pallas_src>
import functools

import jax
import jax.numpy as jnp
from jax import lax
from jax.experimental import pallas as pl
from jax.experimental.pallas import tpu as pltpu

_IGNORE_INDEX = -100  # nn.NLLLoss2d default


def _round_up(x, m):
    return ((x + m - 1) // m) * m


def _ce2d_kernel(x_ref, t_ref, loss_ref, cnt_ref, *, ignore_index):
    """One grid step (n, p): logits block (1, C, T), targets block (1, 1, T)."""
    p = pl.program_id(1)

    @pl.when(p == 0)
    def _():
        loss_ref[...] = jnp.zeros_like(loss_ref)
        cnt_ref[...] = jnp.zeros_like(cnt_ref)

    x = x_ref[...].astype(jnp.float32)        # (1, C, T) -- upcast in-register
    t = t_ref[...]                            # (1, 1, T) int32

    # log-softmax over the class (sublane) axis == dim=1 of NCHW.
    m = jnp.max(x, axis=1, keepdims=True)                              # (1, 1, T)
    shifted = x - m                                                    # (1, C, T)
    lse = jnp.log(jnp.sum(jnp.exp(shifted), axis=1, keepdims=True))    # (1, 1, T)

    # Per-pixel gather of the target-class shifted logit via one-hot select.
    class_ids = lax.broadcasted_iota(jnp.int32, x.shape, 1)            # (1, C, T)
    x_tgt = jnp.sum(jnp.where(class_ids == t, shifted, 0.0),
                    axis=1, keepdims=True)                             # (1, 1, T)

    # Mask ignored pixels (padded tail pixels also carry target==ignore_index).
    valid = t != ignore_index                                          # (1, 1, T)
    loss_ref[...] += jnp.where(valid, lse - x_tgt, 0.0)
    cnt_ref[...] += valid.astype(jnp.float32)


def _choose_tile_px(c, num_px, itemsize, budget_bytes):
    """Largest 128-multiple pixel tile whose VMEM working set fits the budget."""
    c_pad = _round_up(c, max(8, 32 // itemsize))  # sublane padding of logits block
    per_px = (2 * c_pad * itemsize                # double-buffered logits block
              + 2 * 8 * 4                         # double-buffered int32 targets
              + 2 * 2 * 8 * 4)                    # two resident f32 partial blocks
    tile = max(128, (budget_bytes // per_px) // 128 * 128)
    return int(min(tile, _round_up(num_px, 128)))


def cross_entropy_loss_2d(inputs, targets, *,
                          ignore_index=_IGNORE_INDEX,
                          vmem_budget_bytes=16 * 1024 * 1024):
    """inputs: [N, C, H, W] float; targets: [N, H, W] int -> scalar mean loss."""
    n, c, h, w = inputs.shape
    num_px = h * w

    # Free reshapes only -- no materialized transpose; keep the input dtype
    # (bf16 stays bf16 in HBM; upcast happens inside the kernel).
    x = inputs.reshape(n, c, num_px)
    t = targets.astype(jnp.int32).reshape(n, 1, num_px)

    itemsize = x.dtype.itemsize
    tile_px = _choose_tile_px(c, num_px, itemsize, vmem_budget_bytes)
    num_p = pl.cdiv(num_px, tile_px)
    px_pad = num_p * tile_px
    if px_pad != num_px:
        # Ragged tail: pad pixels; padded targets carry ignore_index so they
        # contribute nothing to the loss nor to the mean denominator.
        x = jnp.pad(x, ((0, 0), (0, 0), (0, px_pad - num_px)))
        t = jnp.pad(t, ((0, 0), (0, 0), (0, px_pad - num_px)),
                    constant_values=ignore_index)

    kernel = functools.partial(_ce2d_kernel, ignore_index=ignore_index)

    x_bytes = n * c * px_pad * itemsize
    t_bytes = n * px_pad * 4
    o_bytes = 2 * n * tile_px * 4
    cost = pl.CostEstimate(
        flops=8 * n * c * px_pad,
        transcendentals=n * c * px_pad + n * px_pad,
        bytes_accessed=x_bytes + t_bytes + o_bytes,
    )

    loss_parts, cnt_parts = pl.pallas_call(
        kernel,
        out_shape=(
            jax.ShapeDtypeStruct((n, 1, tile_px), jnp.float32),
            jax.ShapeDtypeStruct((n, 1, tile_px), jnp.float32),
        ),
        grid_spec=pltpu.PrefetchScalarGridSpec(
            num_scalar_prefetch=0,
            grid=(n, num_p),
            in_specs=[
                pl.BlockSpec((1, c, tile_px), lambda i, j: (i, 0, j)),
                pl.BlockSpec((1, 1, tile_px), lambda i, j: (i, 0, j)),
            ],
            out_specs=[
                pl.BlockSpec((1, 1, tile_px), lambda i, j: (i, 0, 0)),
                pl.BlockSpec((1, 1, tile_px), lambda i, j: (i, 0, 0)),
            ],
        ),
        compiler_params=pltpu.CompilerParams(
            dimension_semantics=("parallel", "arbitrary"),
            vmem_limit_bytes=min(64 * 1024 * 1024,
                                 max(32 * 1024 * 1024, 2 * vmem_budget_bytes)),
        ),
        cost_estimate=cost,
    )(x, t)

    loss_sum = jnp.sum(loss_parts, dtype=jnp.float32)
    n_valid = jnp.sum(cnt_parts, dtype=jnp.float32)
    # weight=None, size_average=True -> mean over (non-ignored) pixels.
    # TODO(synk): optional per-class `weight` tensor not implemented (module default is None).
    return loss_sum / n_valid


if __name__ == "__main__":
    key = jax.random.PRNGKey(0)
    k_x, k_t = jax.random.split(key)

    N, C, H, W = 2, 4, 16, 16
    inputs = jax.random.normal(k_x, (N, C, H, W), dtype=jnp.float32)
    targets = jax.random.randint(k_t, (N, H, W), 0, C, dtype=jnp.int32)

    loss = cross_entropy_loss_2d(inputs, targets)
    jax.block_until_ready(loss)

    # Pure-JAX reference: F.log_softmax(dim=1) + NLLLoss2d(mean over pixels).
    logp = jax.nn.log_softmax(inputs.astype(jnp.float32), axis=1)
    nll = -jnp.take_along_axis(logp, targets[:, None, :, :], axis=1)[:, 0]
    ref = jnp.mean(nll)
    assert jnp.allclose(loss, ref, rtol=1e-5, atol=1e-5), (loss, ref)

    print("KERNEL_OK")
</pallas_src>

<mosaic_0001>
module attributes {stable_mosaic.version = 11 : i64} {
  func.func @_ce2d_kernel(%arg0: i32, %arg1: i32, %arg2: memref<1x4x256xf32, #tpu.memory_space<vmem>>, %arg3: memref<1x1x256xi32, #tpu.memory_space<vmem>>, %arg4: memref<1x1x256xf32, #tpu.memory_space<vmem>>, %arg5: memref<1x1x256xf32, #tpu.memory_space<vmem>>) attributes {dimension_semantics = [#tpu.dimension_semantics<parallel>, #tpu.dimension_semantics<arbitrary>], iteration_bounds = array<i64: 2, 1>, scalar_prefetch = 0 : i64, scratch_operands = 0 : i64, tpu.core_type = #tpu.core_type<tc>, window_params = [{transform_indices = @transform_0, window_bounds = array<i64: 1, 4, 256>}, {transform_indices = @transform_1, window_bounds = array<i64: 1, 1, 256>}, {transform_indices = @transform_2, window_bounds = array<i64: 1, 1, 256>}, {transform_indices = @transform_3, window_bounds = array<i64: 1, 1, 256>}]} {
    %c0_i32 = arith.constant 0 : i32
    %0 = arith.cmpi eq, %arg1, %c0_i32 : i32
    %1 = arith.extui %0 : i1 to i32
    %c0_i32_0 = arith.constant 0 : i32
    %2 = arith.cmpi ne, %1, %c0_i32_0 : i32
    scf.if %2 {
      %cst_22 = arith.constant 0.000000e+00 : f32
      %33 = vector.broadcast %cst_22 : f32 to vector<1x1x256xf32>
      %c0_23 = arith.constant 0 : index
      %c0_24 = arith.constant 0 : index
      %c0_25 = arith.constant 0 : index
      %34 = vector.load %arg4[%c0_23, %c0_24, %c0_25] : memref<1x1x256xf32, #tpu.memory_space<vmem>>, vector<1x1x256xf32>
      tpu.vector_store %arg4[%c0_23, %c0_24, %c0_25], %33 {strides = array<i32>} : memref<1x1x256xf32, #tpu.memory_space<vmem>>, vector<1x1x256xf32>,
      %cst_26 = arith.constant 0.000000e+00 : f32
      %35 = vector.broadcast %cst_26 : f32 to vector<1x1x256xf32>
      %c0_27 = arith.constant 0 : index
      %c0_28 = arith.constant 0 : index
      %c0_29 = arith.constant 0 : index
      %36 = vector.load %arg5[%c0_27, %c0_28, %c0_29] : memref<1x1x256xf32, #tpu.memory_space<vmem>>, vector<1x1x256xf32>
      tpu.vector_store %arg5[%c0_27, %c0_28, %c0_29], %35 {strides = array<i32>} : memref<1x1x256xf32, #tpu.memory_space<vmem>>, vector<1x1x256xf32>,
    } else {
    }
    %c0 = arith.constant 0 : index
    %c0_1 = arith.constant 0 : index
    %c0_2 = arith.constant 0 : index
    %3 = vector.load %arg2[%c0, %c0_1, %c0_2] : memref<1x4x256xf32, #tpu.memory_space<vmem>>, vector<1x4x256xf32>
    %c0_3 = arith.constant 0 : index
    %c0_4 = arith.constant 0 : index
    %c0_5 = arith.constant 0 : index
    %4 = vector.load %arg3[%c0_3, %c0_4, %c0_5] : memref<1x1x256xi32, #tpu.memory_space<vmem>>, vector<1x1x256xi32>
    %cst = arith.constant dense<0xFF800000> : vector<1x256xf32>
    %5 = vector.multi_reduction <maximumf>, %3, %cst [1] : vector<1x4x256xf32> to vector<1x256xf32>
    %6 = vector.shape_cast %5 : vector<1x256xf32> to vector<1x1x256xf32>
    %7 = vector.broadcast %6 : vector<1x1x256xf32> to vector<1x4x256xf32>
    %8 = arith.subf %3, %7 : vector<1x4x256xf32>
    %9 = math.exp %8 : vector<1x4x256xf32>
    %cst_6 = arith.constant dense<0.000000e+00> : vector<1x256xf32>
    %10 = vector.multi_reduction <add>, %9, %cst_6 [1] : vector<1x4x256xf32> to vector<1x256xf32>
    %11 = vector.shape_cast %10 : vector<1x256xf32> to vector<1x1x256xf32>
    %12 = math.log %11 : vector<1x1x256xf32>
    %13 = tpu.iota {dimensions = array<i32: 1>} : vector<1x4x256xi32>
    %14 = vector.broadcast %4 : vector<1x1x256xi32> to vector<1x4x256xi32>
    %15 = arith.cmpi eq, %13, %14 : vector<1x4x256xi32>
    %cst_7 = arith.constant 0.000000e+00 : f32
    %16 = vector.broadcast %cst_7 : f32 to vector<1x4x256xf32>
    %17 = arith.select %15, %8, %16 : vector<1x4x256xi1>, vector<1x4x256xf32>
    %cst_8 = arith.constant dense<0.000000e+00> : vector<1x256xf32>
    %18 = vector.multi_reduction <add>, %17, %cst_8 [1] : vector<1x4x256xf32> to vector<1x256xf32>
    %19 = vector.shape_cast %18 : vector<1x256xf32> to vector<1x1x256xf32>
    %c-100_i32 = arith.constant -100 : i32
    %20 = vector.broadcast %c-100_i32 : i32 to vector<1x1x256xi32>
    %21 = arith.cmpi ne, %4, %20 : vector<1x1x256xi32>
    %c0_9 = arith.constant 0 : index
    %c0_10 = arith.constant 0 : index
    %c0_11 = arith.constant 0 : index
    %22 = vector.load %arg4[%c0_9, %c0_10, %c0_11] : memref<1x1x256xf32, #tpu.memory_space<vmem>>, vector<1x1x256xf32>
    %23 = arith.subf %12, %19 : vector<1x1x256xf32>
    %cst_12 = arith.constant 0.000000e+00 : f32
    %24 = vector.broadcast %cst_12 : f32 to vector<1x1x256xf32>
    %25 = arith.select %21, %23, %24 : vector<1x1x256xi1>, vector<1x1x256xf32>
    %26 = arith.addf %22, %25 : vector<1x1x256xf32>
    %c0_13 = arith.constant 0 : index
    %c0_14 = arith.constant 0 : index
    %c0_15 = arith.constant 0 : index
    %27 = vector.load %arg4[%c0_13, %c0_14, %c0_15] : memref<1x1x256xf32, #tpu.memory_space<vmem>>, vector<1x1x256xf32>
    tpu.vector_store %arg4[%c0_13, %c0_14, %c0_15], %26 {strides = array<i32>} : memref<1x1x256xf32, #tpu.memory_space<vmem>>, vector<1x1x256xf32>,
    %c0_16 = arith.constant 0 : index
    %c0_17 = arith.constant 0 : index
    %c0_18 = arith.constant 0 : index
    %28 = vector.load %arg5[%c0_16, %c0_17, %c0_18] : memref<1x1x256xf32, #tpu.memory_space<vmem>>, vector<1x1x256xf32>
    %29 = arith.extui %21 : vector<1x1x256xi1> to vector<1x1x256xi32>
    %30 = arith.sitofp %29 : vector<1x1x256xi32> to vector<1x1x256xf32>
    %31 = arith.addf %28, %30 : vector<1x1x256xf32>
    %c0_19 = arith.constant 0 : index
    %c0_20 = arith.constant 0 : index
    %c0_21 = arith.constant 0 : index
    %32 = vector.load %arg5[%c0_19, %c0_20, %c0_21] : memref<1x1x256xf32, #tpu.memory_space<vmem>>, vector<1x1x256xf32>
    tpu.vector_store %arg5[%c0_19, %c0_20, %c0_21], %31 {strides = array<i32>} : memref<1x1x256xf32, #tpu.memory_space<vmem>>, vector<1x1x256xf32>,
    return
  }
  func.func @transform_0(%arg0: i32, %arg1: i32) -> (i32, i32, i32) {
    %c0_i32 = arith.constant 0 : i32
    %c0_i32_0 = arith.constant 0 : i32
    return %arg0, %c0_i32, %arg1 : i32, i32, i32
  }
  func.func @transform_1(%arg0: i32, %arg1: i32) -> (i32, i32, i32) {
    %c0_i32 = arith.constant 0 : i32
    %c0_i32_0 = arith.constant 0 : i32
    return %arg0, %c0_i32, %arg1 : i32, i32, i32
  }
  func.func @transform_2(%arg0: i32, %arg1: i32) -> (i32, i32, i32) {
    %c0_i32 = arith.constant 0 : i32
    %c0_i32_0 = arith.constant 0 : i32
    %c0_i32_1 = arith.constant 0 : i32
    return %arg0, %c0_i32, %c0_i32_0 : i32, i32, i32
  }
  func.func @transform_3(%arg0: i32, %arg1: i32) -> (i32, i32, i32) {
    %c0_i32 = arith.constant 0 : i32
    %c0_i32_0 = arith.constant 0 : i32
    %c0_i32_1 = arith.constant 0 : i32
    return %arg0, %c0_i32, %c0_i32_0 : i32, i32, i32
  }
}

</mosaic_0001>

<llo_original>
// kernel: tpu_custom_call.1
$region0: #{tpu_custom_call.1}
  #allocation0 [shape = 'u32[]', space=smem, size = 0x4, offset = 0x4, fixed_abs, tag = 'smem constant byte address 0x4 - core index']
  #allocation1 [shape = 'u32[144,128]{1,0:T(1,128)}', space=vmem, size = 0x12000, scoped, tag = 'internal scratch']
  %s0 = inlined_call_operand.hbm [shape: f32[2,4,256], index: 0, kind: input, shape index: {}]
  %s1 = inlined_call_operand.hbm [shape: s32[2,1,256], index: 1, kind: input, shape index: {}]
  %s2 = inlined_call_operand.hbm [shape: f32[2,1,256], index: 2, kind: output, shape index: {0}]
  %s3 = inlined_call_operand.hbm [shape: f32[2,1,256], index: 3, kind: output, shape index: {1}]
  %4 = xla_tuple %s2, %s3
  %s5 = sld [smem:[#allocation0]]
  $region61: #{tpu_custom_call.1} parent=0
    _
  %s7 = ssub.s32 1, %s5
  %s8 = scalar_select 0, %s7, %s5
  $region1: #{tpu_custom_call.1} parent=0
    #allocation2 [shape = 'u8[8192]{0}', space=vmem, size = 0x2000, scoped, tag = 'input window, operand 0']
    #allocation3 [shape = 's32[2]{0}', space=sflag, size = 0x8, scoped, tag = 'scoped memory for tpu_custom_call.1']
    #allocation4 [shape = 's32[2]{0}', space=sflag, size = 0x8, scoped, tag = 'scoped memory for tpu_custom_call.1']
    #allocation5 [shape = 'u8[2048]{0}', space=vmem, size = 0x800, scoped, tag = 'input window, operand 1']
    #allocation6 [shape = 's32[2]{0}', space=sflag, size = 0x8, scoped, tag = 'scoped memory for tpu_custom_call.1']
    #allocation7 [shape = 'u8[2048]{0}', space=vmem, size = 0x800, scoped, tag = 'output window, operand 0']
    #allocation8 [shape = 'u8[2048]{0}', space=vmem, size = 0x800, scoped, tag = 'output window, operand 1']
    #allocation9 [shape = 's32[2]{0}', space=sflag, size = 0x8, scoped, tag = 'scoped memory for tpu_custom_call.1']
    %9 = vsyncpa [#allocation3], 0
    %s10 = scalar_lea.sflag [#allocation3], 1
    %11 = vsyncpa %s10, 0
    %12 = vsyncpa [#allocation6], 0
    %s13 = scalar_lea.sflag [#allocation6], 1
    %14 = vsyncpa %s13, 0
    %15 = vsyncpa [#allocation4], 0
    %s16 = scalar_lea.sflag [#allocation4], 1
    %17 = vsyncpa %s16, 0
    %18 = vsyncpa [#allocation9], 0
    %s19 = scalar_lea.sflag [#allocation9], 1
    %20 = vsyncpa %s19, 0
    loop: start=0, step=1, limit=4
    $region2: #{tpu_custom_call.1} parent=1 // loop_pre_header
      _
    $region3: #{tpu_custom_call.1} parent=1 // loop_header
      %s22 = sphi 0, %s26
      %p23 = scmp.ge.s32.totalorder %s22, 4
      %s29 = sphi 0, %s41
      %s30 = sphi 0, %s37
      %s31 = sphi 0, %s29
      %s32 = sphi 0, %s30
      %s33 = sphi 0, %s31
      %s34 = sphi 0, %s32
      %s46 = sphi 0, %s48
      %s49 = sphi 0, %s46
      %s50 = sphi 0, %s49
      %s66 = sphi 0, %s50
      %s74 = sphi 0, %s76
      %s77 = sphi 0, %s74
      %s78 = sphi 0, %s77
      %s94 = sphi 0, %s78
      %s100 = sphi 0, %s102
      %s103 = sphi 0, %s100
      %s104 = sphi 0, %s103
      %s120 = sphi 0, %s104
      %s126 = sphi 0, %s128
      %s129 = sphi 0, %s126
      %s130 = sphi 0, %s129
      %s146 = sphi 0, %s130
    $region4: #{tpu_custom_call.1} parent=1 // loop_header_branch
      %25 = sbr.rel (%p23) target = $region8
    $region5: #{tpu_custom_call.1} parent=1 // loop_body
      %s27 = ssub.s32 %s22, 1
      %s28 = ssub.s32 %s22, 2
      %s35 = sadd.s32 1, %s30
      %p36 = scmp.ge.s32.totalorder %s35, 1
      %s37 = scalar_select %p36, 0, %s35
      %s38 = sadd.s32 1, %s29
      %s39 = scalar_select %p36, %s38, %s29
      %p40 = scmp.ge.s32.totalorder %s39, 2
      %s41 = scalar_select %p40, 0, %s39
      %s42 = ssub.s32 %s29, %s41
      %s43 = ssub.s32 %s30, %s37
      %s44 = sor.u32 %s42, %s43
      %p45 = scmp.eq.s32.totalorder %s44, 0
      %s47 = sadd.s32 %s46, 1
      %s48 = scalar_select %p45, %s46, %s47
      %p51 = pneg %p45
      %p52 = scmp.eq.s32.totalorder %s22, 1
      %p53 = por %p51, %p52
      %p54 = scmp.ne.s32.totalorder %s46, %s49
      %p55 = scmp.eq.s32.totalorder %s22, 0
      %p56 = por %p54, %p55
      %p57 = scmp.ne.s32.totalorder %s46, %s49
      %p58 = scmp.eq.s32.totalorder %s27, 1
      %p59 = por %p57, %p58
      %p60 = scmp.ne.s32.totalorder %s49, %s50
      %p61 = scmp.eq.s32.totalorder %s27, 0
      %p62 = por %p60, %p61
      %p63 = scmp.ne.s32.totalorder %s49, %s50
      %p64 = scmp.eq.s32.totalorder %s28, 1
      %p65 = por %p63, %p64
      %p67 = scmp.ne.s32.totalorder %s50, %s66
      %p68 = scmp.eq.s32.totalorder %s28, 0
      %p69 = por %p67, %p68
      %s70 = ssub.s32 %s29, %s41
      %s71 = ssub.s32 %s30, %s37
      %s72 = sor.u32 %s70, %s71
      %p73 = scmp.eq.s32.totalorder %s72, 0
      %s75 = sadd.s32 %s74, 1
      %s76 = scalar_select %p73, %s74, %s75
      %p79 = pneg %p73
      %p80 = scmp.eq.s32.totalorder %s22, 1
      %p81 = por %p79, %p80
      %p82 = scmp.ne.s32.totalorder %s74, %s77
      %p83 = scmp.eq.s32.totalorder %s22, 0
      %p84 = por %p82, %p83
      %p85 = scmp.ne.s32.totalorder %s74, %s77
      %p86 = scmp.eq.s32.totalorder %s27, 1
      %p87 = por %p85, %p86
      %p88 = scmp.ne.s32.totalorder %s77, %s78
      %p89 = scmp.eq.s32.totalorder %s27, 0
      %p90 = por %p88, %p89
      %p91 = scmp.ne.s32.totalorder %s77, %s78
      %p92 = scmp.eq.s32.totalorder %s28, 1
      %p93 = por %p91, %p92
      %p95 = scmp.ne.s32.totalorder %s78, %s94
      %p96 = scmp.eq.s32.totalorder %s28, 0
      %p97 = por %p95, %p96
      %s98 = ssub.s32 %s29, %s41
      %p99 = scmp.eq.s32.totalorder %s98, 0
      %s101 = sadd.s32 %s100, 1
      %s102 = scalar_select %p99, %s100, %s101
      %p105 = pneg %p99
      %p106 = scmp.eq.s32.totalorder %s22, 1
      %p107 = por %p105, %p106
      %p108 = scmp.ne.s32.totalorder %s100, %s103
      %p109 = scmp.eq.s32.totalorder %s22, 0
      %p110 = por %p108, %p109
      %p111 = scmp.ne.s32.totalorder %s100, %s103
      %p112 = scmp.eq.s32.totalorder %s27, 1
      %p113 = por %p111, %p112
      %p114 = scmp.ne.s32.totalorder %s103, %s104
      %p115 = scmp.eq.s32.totalorder %s27, 0
      %p116 = por %p114, %p115
      %p117 = scmp.ne.s32.totalorder %s103, %s104
      %p118 = scmp.eq.s32.totalorder %s28, 1
      %p119 = por %p117, %p118
      %p121 = scmp.ne.s32.totalorder %s104, %s120
      %p122 = scmp.eq.s32.totalorder %s28, 0
      %p123 = por %p121, %p122
      %s124 = ssub.s32 %s29, %s41
      %p125 = scmp.eq.s32.totalorder %s124, 0
      %s127 = sadd.s32 %s126, 1
      %s128 = scalar_select %p125, %s126, %s127
      %p131 = pneg %p125
      %p132 = scmp.eq.s32.totalorder %s22, 1
      %p133 = por %p131, %p132
      %p134 = scmp.ne.s32.totalorder %s126, %s129
      %p135 = scmp.eq.s32.totalorder %s22, 0
      %p136 = por %p134, %p135
      %p137 = scmp.ne.s32.totalorder %s126, %s129
      %p138 = scmp.eq.s32.totalorder %s27, 1
      %p139 = por %p137, %p138
      %p140 = scmp.ne.s32.totalorder %s129, %s130
      %p141 = scmp.eq.s32.totalorder %s27, 0
      %p142 = por %p140, %p141
      %p143 = scmp.ne.s32.totalorder %s129, %s130
      %p144 = scmp.eq.s32.totalorder %s28, 1
      %p145 = por %p143, %p144
      %p147 = scmp.ne.s32.totalorder %s130, %s146
      %p148 = scmp.eq.s32.totalorder %s28, 0
      %p149 = por %p147, %p148
      %p150 = scmp.le.s32.totalorder 1, %s22
      %p151 = scmp.lt.s32.totalorder %s22, 3
      %p152 = pnand %p150, %p151
      %p153 = pneg %p152
      // Predicated region
      $region9: #{tpu_custom_call.1} parent=5 // pred_check
        _
      $region10: #{tpu_custom_call.1} parent=5 // pred_check_branch
        %155 = sbr.rel (%p152) target = $region12
      $region11: #{tpu_custom_call.1} parent=5 // pred_region
        %s156 = ssub.s32 %s22, 1
      $region12: #{tpu_custom_call.1} parent=5 // pred_fallthru
        _
      %p157 = scmp.lt.s32.totalorder %s22, 2
      // Predicated region
      $region13: #{tpu_custom_call.1} parent=5 // pred_check
        %p158 = pneg %p157
      $region14: #{tpu_custom_call.1} parent=5 // pred_check_branch
        %160 = sbr.rel (%p158) target = $region16
      $region15: #{tpu_custom_call.1} parent=5 // pred_region
        // Predicated region
        $region17: #{tpu_custom_call.1} parent=15 // pred_check
          %p161 = pneg %p56
        $region18: #{tpu_custom_call.1} parent=15 // pred_check_branch
          %163 = sbr.rel (%p161) target = $region20
        $region19: #{tpu_custom_call.1} parent=15 // pred_region
          %s164 = sand.u32 %s46, 1
          %s165 = scalar_lea.sflag [#allocation3], %s164
          %s166 = sand.u32 %s46, 1
          %s167 = smul.addr %s166, 8
          %s168 = scalar_lea.vmem [#allocation2], %s167
          %s169 = smul.u32 2, %s30
          %s171 = ssub.s32 128, 128
          %172 = vsyncadd %s165, %s171
          %s173 = smul.addr %s29, 2
          %s174 = sadd.s32 %s169, %s173
          %s175 = smul.addr %s174, 64
          %s176 = scalar_lea.hbm %s0, %s175
          %s178 = sshll.u32 %s168, 4
          %s179 = int_to_ptr.vmem [resolvable:$true] %s178
          %181 = dma.hbm_to_vmem [thread:$0]  %s176, 128, %s179, %s165
        $region20: #{tpu_custom_call.1} parent=15 // pred_fallthru
          _
        // Predicated region
        $region21: #{tpu_custom_call.1} parent=15 // pred_check
          %p182 = pneg %p84
        $region22: #{tpu_custom_call.1} parent=15 // pred_check_branch
          %184 = sbr.rel (%p182) target = $region24
        $region23: #{tpu_custom_call.1} parent=15 // pred_region
          %s185 = sand.u32 %s74, 1
          %s186 = scalar_lea.sflag [#allocation6], %s185
          %s187 = sand.u32 %s74, 1
          %s188 = smul.addr %s187, 2
          %s189 = scalar_lea.vmem [#allocation5], %s188
          %s190 = smul.u32 2, %s30
          %s192 = ssub.s32 32, 32
          %193 = vsyncadd %s186, %s192
          %s194 = smul.addr %s29, 2
          %s195 = sadd.s32 %s190, %s194
          %s196 = smul.addr %s195, 16
          %s197 = scalar_lea.hbm %s1, %s196
          %s199 = sshll.u32 %s189, 4
          %s200 = int_to_ptr.vmem [resolvable:$true] %s199
          %202 = dma.hbm_to_vmem [thread:$0]  %s197, 32, %s200, %s186
        $region24: #{tpu_custom_call.1} parent=15 // pred_fallthru
          _
      $region16: #{tpu_custom_call.1} parent=5 // pred_fallthru
        _
      %p203 = scmp.le.s32.totalorder 1, %s22
      %p204 = scmp.lt.s32.totalorder %s22, 3
      %p205 = pnand %p203, %p204
      %p206 = pneg %p205
      // Predicated region
      $region25: #{tpu_custom_call.1} parent=5 // pred_check
        _
      $region26: #{tpu_custom_call.1} parent=5 // pred_check_branch
        %208 = sbr.rel (%p205) target = $region28
      $region27: #{tpu_custom_call.1} parent=5 // pred_region
        %s209 = ssub.s32 %s22, 1
        %s210 = sand.u32 %s49, 1
        %s211 = scalar_lea.sflag [#allocation3], %s210
        %s212 = sand.u32 %s49, 1
        %s213 = smul.addr %s212, 8
        %s214 = scalar_lea.vmem [#allocation2], %s213
        // Predicated region
        $region29: #{tpu_custom_call.1} parent=27 // pred_check
          %p215 = pneg %p62
        $region30: #{tpu_custom_call.1} parent=27 // pred_check_branch
          %217 = sbr.rel (%p215) target = $region32
        $region31: #{tpu_custom_call.1} parent=27 // pred_region
          %218 = dma.done %s211, 128
        $region32: #{tpu_custom_call.1} parent=27 // pred_fallthru
          _
        %s219 = sand.u32 %s77, 1
        %s220 = scalar_lea.sflag [#allocation6], %s219
        %s221 = sand.u32 %s77, 1
        %s222 = smul.addr %s221, 2
        %s223 = scalar_lea.vmem [#allocation5], %s222
        // Predicated region
        $region33: #{tpu_custom_call.1} parent=27 // pred_check
          %p224 = pneg %p90
        $region34: #{tpu_custom_call.1} parent=27 // pred_check_branch
          %226 = sbr.rel (%p224) target = $region36
        $region35: #{tpu_custom_call.1} parent=27 // pred_region
          %227 = dma.done %s220, 32
        $region36: #{tpu_custom_call.1} parent=27 // pred_fallthru
          _
        %s228 = sand.u32 %s49, 1
        %s229 = scalar_lea.sflag [#allocation3], %s228
        %s230 = sand.u32 %s49, 1
        %s231 = smul.addr %s230, 8
        %s232 = scalar_lea.vmem [#allocation2], %s231
        %p233 = pneg %p62
        %p234 = pneg %p59
        %s235 = sand.u32 %s77, 1
        %s236 = scalar_lea.sflag [#allocation6], %s235
        %s237 = sand.u32 %s77, 1
        %s238 = smul.addr %s237, 2
        %s239 = scalar_lea.vmem [#allocation5], %s238
        %p240 = pneg %p90
        %p241 = pneg %p87
        %p242 = pneg %p116
        %p243 = pneg %p113
        %s244 = sand.u32 %s103, 1
        %s245 = scalar_lea.sflag [#allocation4], %s244
        %s246 = sand.u32 %s103, 1
        %s247 = smul.addr %s246, 2
        %s248 = scalar_lea.vmem [#allocation7], %s247
        %p249 = pneg %p142
        %p250 = pneg %p139
        %s251 = sand.u32 %s129, 1
        %s252 = scalar_lea.sflag [#allocation9], %s251
        %s253 = sand.u32 %s129, 1
        %s254 = smul.addr %s253, 2
        %s255 = scalar_lea.vmem [#allocation8], %s254
        %s256 = smul.u32 2, %s32
        %s257 = smul.u32 2, %s32
        %p258 = scmp.eq.s32.totalorder %s32, 0
        // Predicated region
        $region37: #{tpu_custom_call.1} parent=27 // pred_check
          %p259 = pneg %p258
        $region38: #{tpu_custom_call.1} parent=27 // pred_check_branch
          %261 = sbr.rel (%p259) target = $region40
        $region39: #{tpu_custom_call.1} parent=27 // pred_region
          %v262 = vlaneseq
          %vm263 = vcmp.ge.s32.totalorder %v262, 0
          %vm264 = vcmp.lt.s32.totalorder %v262, 256
          %vm265 = vmand %vm263, %vm264
          %266 = vst.msk [vmem:[%s248] sm:$0x3] %vm265, 0.0
          %267 = vst.msk [vmem:[%s255] sm:$0x3] %vm265, 0.0
        $region40: #{tpu_custom_call.1} parent=27 // pred_fallthru
          _
        %v268 = vld [vmem:[%s214] sm:$0xff]
        %v269 = vld [vmem:[%s223] sm:$0x3]
        %v271 = vcombine.high %v268, %v268
        %vm273 = vcmask 1043456
        %v274 = vsel %vm273, %v268, -inf
        %v275 = vrot.slane %v274, 4
        %v276 = vmax.f32 %v274, %v275
        %v277 = vrot.slane %v276, 2
        %v278 = vmax.f32 %v276, %v277
        %v279 = vrot.slane %v278, 1
        %v280 = vmax.f32 %v278, %v279
        %v281 = vsel %vm273, %v271, -inf
        %v282 = vrot.slane %v281, 4
        %v283 = vmax.f32 %v281, %v282
        %v284 = vrot.slane %v283, 2
        %v285 = vmax.f32 %v283, %v284
        %v286 = vrot.slane %v285, 1
        %v287 = vmax.f32 %v285, %v286
        %v290 = vcombine.low %v280, %v287
        %v292 = vsub.f32 %v268, %v290
        %v293 = vmul.f32 %v292, 1.442695
        %v294 = vpow.pop %v293
        %v296 = vcombine.high %v294, %v294
        %v298 = vsel %vm273, %v294, 0.0
        %v299 = vrot.slane %v298, 4
        %v300 = vadd.f32 %v298, %v299
        %v301 = vrot.slane %v300, 2
        %v302 = vadd.f32 %v300, %v301
        %v303 = vrot.slane %v302, 1
        %v304 = vadd.f32 %v302, %v303
        %v305 = vsel %vm273, %v296, 0.0
        %v306 = vrot.slane %v305, 4
        %v307 = vadd.f32 %v305, %v306
        %v308 = vrot.slane %v307, 2
        %v309 = vadd.f32 %v307, %v308
        %v310 = vrot.slane %v309, 1
        %v311 = vadd.f32 %v309, %v310
        %v312 = vlog2.pop %v304
        %v313 = vmul.f32 %v312, 0.6931472
        %v314 = vlog2.pop %v311
        %v315 = vmul.f32 %v314, 0.6931472
        %v316 = vlaneseq
        %v317 = vshrl.u32 %v316, 7
        %v318 = vlaneseq
        %v319 = vshrl.u32 %v318, 7
        %v320 = vsub.s32 0, %v319
        %v321 = vrot.slane %v269, %v320
        %v322 = vlaneseq
        %v323 = vshrl.u32 %v322, 7
        %v324 = vsub.s32 1, %v323
        %v325 = vrot.slane %v269, %v324
        %vm326 = vcmp.eq.s32.totalorder %v317, %v321
        %vm327 = vcmp.eq.s32.totalorder %v317, %v325
        %v329 = vcombine.high %v292, %v292
        %v331 = vsel %vm326, %v292, 0.0
        %v332 = vsel %vm327, %v329, 0.0
        %v333 = vsel %vm273, %v331, 0.0
        %v334 = vrot.slane %v333, 4
        %v335 = vadd.f32 %v333, %v334
        %v336 = vrot.slane %v335, 2
        %v337 = vadd.f32 %v335, %v336
        %v338 = vrot.slane %v337, 1
        %v339 = vadd.f32 %v337, %v338
        %v340 = vsel %vm273, %v332, 0.0
        %v341 = vrot.slane %v340, 4
        %v342 = vadd.f32 %v340, %v341
        %v343 = vrot.slane %v342, 2
        %v344 = vadd.f32 %v342, %v343
        %v345 = vrot.slane %v344, 1
        %v346 = vadd.f32 %v344, %v345
        %vm347 = vcmp.ne.s32.totalorder %v269, 4294967196
        %v348 = vld [vmem:[%s248] sm:$0x3]
        %v349 = vsub.f32 %v313, %v339
        %v350 = vsub.f32 %v315, %v346
        %v353 = vcombine.low %v349, %v350
        %v355 = vunpack.c.l.s4 1966171168
        %v356 = vunpack.c.0.s8 %v355
        %v357 = vlaneseq
        %v358 = vshrl.u32 %v357, 7
        %v359 = vsub.s32 %v356, %v358
        %v360 = vrot.slane %v353, %v359
        %v362 = vunpack.c.l.s4 1966171168
        %v363 = vunpack.c.0.s8 %v362
        %v364 = vlaneseq
        %v365 = vshrl.u32 %v364, 7
        %v366 = vsub.s32 %v363, %v365
        %v367 = vrot.slane %v360, %v366
        %v369 = vsel %vm347, %v367, 0.0
        %v370 = vadd.f32 %v348, %v369
        %v371 = vlaneseq
        %vm372 = vcmp.ge.s32.totalorder %v371, 0
        %vm373 = vcmp.lt.s32.totalorder %v371, 256
        %vm374 = vmand %vm372, %vm373
        %375 = vst.msk [vmem:[%s248] sm:$0x3] %vm374, %v370
        %v376 = vld [vmem:[%s255] sm:$0x3]
        %v377 = vsel %vm347, 1, 0
        %v378 = vcvt.s32.f32 %v377
        %v379 = vadd.f32 %v376, %v378
        %380 = vst.msk [vmem:[%s255] sm:$0x3] %vm374, %v379
        %s381 = sand.u32 %s103, 1
        %s382 = scalar_lea.sflag [#allocation4], %s381
        %s383 = sand.u32 %s103, 1
        %s384 = smul.addr %s383, 2
        %s385 = scalar_lea.vmem [#allocation7], %s384
        %s386 = sand.u32 %s129, 1
        %s387 = scalar_lea.sflag [#allocation9], %s386
        %s388 = sand.u32 %s129, 1
        %s389 = smul.addr %s388, 2
        %s390 = scalar_lea.vmem [#allocation8], %s389
        // Predicated region
        $region41: #{tpu_custom_call.1} parent=27 // pred_check
          %p391 = pneg %p113
        $region42: #{tpu_custom_call.1} parent=27 // pred_check_branch
          %393 = sbr.rel (%p391) target = $region44
        $region43: #{tpu_custom_call.1} parent=27 // pred_region
          %s395 = ssub.s32 32, 32
          %396 = vsyncadd %s382, %s395
          %s397 = smul.addr %s31, 2
          %s398 = smul.addr %s397, 16
          %s399 = scalar_lea.hbm %s2, %s398
          %s401 = sshll.u32 %s385, 4
          %s402 = int_to_ptr.vmem [resolvable:$true] %s401
          %404 = dma.vmem_to_hbm [thread:$0]  %s402, 32, %s399, %s382
        $region44: #{tpu_custom_call.1} parent=27 // pred_fallthru
          _
        // Predicated region
        $region45: #{tpu_custom_call.1} parent=27 // pred_check
          %p405 = pneg %p139
        $region46: #{tpu_custom_call.1} parent=27 // pred_check_branch
          %407 = sbr.rel (%p405) target = $region48
        $region47: #{tpu_custom_call.1} parent=27 // pred_region
          %s409 = ssub.s32 32, 32
          %410 = vsyncadd %s387, %s409
          %s411 = smul.addr %s31, 2
          %s412 = smul.addr %s411, 16
          %s413 = scalar_lea.hbm %s3, %s412
          %s415 = sshll.u32 %s390, 4
          %s416 = int_to_ptr.vmem [resolvable:$true] %s415
          %418 = dma.vmem_to_hbm [thread:$0]  %s416, 32, %s413, %s387
        $region48: #{tpu_custom_call.1} parent=27 // pred_fallthru
          _
      $region28: #{tpu_custom_call.1} parent=5 // pred_fallthru
        _
      %p419 = scmp.le.s32.totalorder 2, %s22
      // Predicated region
      $region49: #{tpu_custom_call.1} parent=5 // pred_check
        %p420 = pneg %p419
      $region50: #{tpu_custom_call.1} parent=5 // pred_check_branch
        %422 = sbr.rel (%p420) target = $region52
      $region51: #{tpu_custom_call.1} parent=5 // pred_region
        %s423 = ssub.s32 %s22, 2
        // Predicated region
        $region53: #{tpu_custom_call.1} parent=51 // pred_check
          %p424 = pneg %p119
        $region54: #{tpu_custom_call.1} parent=51 // pred_check_branch
          %426 = sbr.rel (%p424) target = $region56
        $region55: #{tpu_custom_call.1} parent=51 // pred_region
          %s427 = sand.u32 %s104, 1
          %s428 = scalar_lea.sflag [#allocation4], %s427
          %s429 = sand.u32 %s104, 1
          %s430 = smul.addr %s429, 2
          %s431 = scalar_lea.vmem [#allocation7], %s430
          %432 = dma.done %s428, 32
        $region56: #{tpu_custom_call.1} parent=51 // pred_fallthru
          _
        // Predicated region
        $region57: #{tpu_custom_call.1} parent=51 // pred_check
          %p433 = pneg %p145
        $region58: #{tpu_custom_call.1} parent=51 // pred_check_branch
          %435 = sbr.rel (%p433) target = $region60
        $region59: #{tpu_custom_call.1} parent=51 // pred_region
          %s436 = sand.u32 %s130, 1
          %s437 = scalar_lea.sflag [#allocation9], %s436
          %s438 = sand.u32 %s130, 1
          %s439 = smul.addr %s438, 2
          %s440 = scalar_lea.vmem [#allocation8], %s439
          %441 = dma.done %s437, 32
        $region60: #{tpu_custom_call.1} parent=51 // pred_fallthru
          _
      $region52: #{tpu_custom_call.1} parent=5 // pred_fallthru
        _
    $region6: #{tpu_custom_call.1} parent=1 // loop_footer
      %s26 = sadd.s32 1, %s22
    $region7: #{tpu_custom_call.1} parent=1 // loop_footer_branch
      %21 = sbr.rel target = $region3
    $region8: #{tpu_custom_call.1} parent=1 // loop_exit
      _
    %442 = vsyncpa [#allocation3], 1
    %s443 = scalar_lea.sflag [#allocation3], 1
    %444 = vsyncpa %s443, 1
    %445 = vsyncpa [#allocation6], 1
    %s446 = scalar_lea.sflag [#allocation6], 1
    %447 = vsyncpa %s446, 1
    %448 = vsyncpa [#allocation4], 1
    %s449 = scalar_lea.sflag [#allocation4], 1
    %450 = vsyncpa %s449, 1
    %451 = vsyncpa [#allocation9], 1
    %s452 = scalar_lea.sflag [#allocation9], 1
    %453 = vsyncpa %s452, 1

</llo_original>
